<compile_context>
chip_gen: v6e
topology: v6e:2x2x1
jax: 0.10.0
libtpu: 0.0.40
codegen_flags: <defaults>
</compile_context>

<pallas_src>
import functools
import math

import jax
import jax.numpy as jnp
from jax import lax
from jax.experimental import pallas as pl
from jax.experimental.pallas import tpu as pltpu


def _round_up(x, m):
    return -(-x // m) * m


def _choose_tiles(length_q, length_k, num_units):
    """Pick (TQ, TK) so the output tile (TQ, TK*U) is lane-dense (last dim a
    multiple of 128) and ~2 MiB of f32 — near the HBM-writeback roofline and
    safe to double-buffer on all of v5e / v6e / v7x."""
    unit = 128 // math.gcd(128, num_units)       # smallest tk with tk*U % 128 == 0
    tq = min(256, _round_up(length_q, 8))
    target_lanes = (2 * 1024 * 1024) // (tq * 4)  # ~2 MiB f32 output tiles
    tk = max(unit, ((target_lanes // num_units) // unit) * unit)
    tk = min(tk, _round_up(length_k, unit))
    return tq, tk


def _rpe_kernel(table_ref, koff_ref, out_ref, *, tq, tk, num_units, max_rel):
    """One (tq, tk*num_units) output tile.

    table_ref: (2P+1, tk*U) f32 — table row v repeated tk times along lanes.
    koff_ref : (1, tk*U) int32  — lane l holds (l // U), the in-tile k offset.
    """
    lanes = tk * num_units
    qi0 = pl.program_id(0) * tq
    kj0 = pl.program_id(1) * tk

    # Tile-wide bounds on the relative distance j - i.
    min_dist = kj0 - (qi0 + tq - 1)
    max_dist = (kj0 + tk - 1) - qi0
    all_hi = min_dist >= max_rel          # whole tile clamps to +P -> row 2P
    all_lo = max_dist <= -max_rel         # whole tile clamps to -P -> row 0
    is_band = jnp.logical_not(jnp.logical_or(all_hi, all_lo))

    # Fast path: fully clamped tile -> broadcast a single (pre-tiled) table row.
    @pl.when(all_hi)
    def _():
        out_ref[...] = jnp.broadcast_to(table_ref[2 * max_rel, :], (tq, lanes))

    @pl.when(jnp.logical_and(all_lo, jnp.logical_not(all_hi)))
    def _():
        out_ref[...] = jnp.broadcast_to(table_ref[0, :], (tq, lanes))

    # General path: tile intersects the |j - i| < P diagonal band.
    # Pure VPU work: iota + clip + (2P) broadcast-selects. No MXU, no reshape.
    @pl.when(is_band)
    def _():
        q_idx = qi0 + lax.broadcasted_iota(jnp.int32, (tq, lanes), 0)
        k_idx = kj0 + koff_ref[...]                              # (1, lanes)
        final = jnp.clip(k_idx - q_idx, -max_rel, max_rel) + max_rel
        acc = jnp.broadcast_to(table_ref[0, :], (tq, lanes))
        for v in range(1, 2 * max_rel + 1):
            acc = jnp.where(final == v, table_ref[v, :][None, :], acc)
        out_ref[...] = acc


def rpe_vanilla_forward(q, embeddings_table, length_q, length_k,
                        max_relative_position, *, tile_q=None, tile_k=None):
    """Pallas implementation of RpeVanilla.forward.

    `q` is accepted for signature parity with the PyTorch module but unused
    (PyTorch only reads q.device).
    """
    del q  # device placement only in the reference implementation
    max_rel = int(max_relative_position)
    vocab, num_units = embeddings_table.shape
    assert vocab == 2 * max_rel + 1

    tq_auto, tk_auto = _choose_tiles(length_q, length_k, num_units)
    tq = tile_q if tile_q is not None else tq_auto
    tk = tile_k if tile_k is not None else tk_auto
    lanes = tk * num_units

    # Tiny layout-plumbing inputs (resident in VMEM across the whole grid):
    #   table_tiled[v, l] = table[v, l % U]   -> lane-dense select operands
    #   k_off[0, l]       = l // U            -> avoids in-kernel int division
    table_tiled = jnp.tile(embeddings_table.astype(jnp.float32), (1, tk))
    k_off = jnp.repeat(jnp.arange(tk, dtype=jnp.int32), num_units)[None, :]

    grid = (pl.cdiv(length_q, tq), pl.cdiv(length_k, tk))
    kernel = functools.partial(_rpe_kernel, tq=tq, tk=tk,
                               num_units=num_units, max_rel=max_rel)

    out2d = pl.pallas_call(
        kernel,
        out_shape=jax.ShapeDtypeStruct((length_q, length_k * num_units),
                                       jnp.float32),
        grid=grid,
        in_specs=[
            pl.BlockSpec((vocab, lanes), lambda i, j: (0, 0)),
            pl.BlockSpec((1, lanes), lambda i, j: (0, 0)),
        ],
        out_specs=pl.BlockSpec((tq, lanes), lambda i, j: (i, j)),
        compiler_params=pltpu.CompilerParams(
            dimension_semantics=("parallel", "parallel"),
            vmem_limit_bytes=32 * 1024 * 1024,
        ),
    )(table_tiled, k_off)

    # (Lq, Lk*U) -> (Lq, Lk, U): same row-major layout, free reshape.
    return out2d.reshape(length_q, length_k, num_units)


def _xavier_uniform(key, shape, dtype=jnp.float32):
    # torch.nn.init.xavier_uniform_ on a 2-D tensor: bound = sqrt(6/(d0+d1)).
    bound = math.sqrt(6.0 / (shape[0] + shape[1]))
    return jax.random.uniform(key, shape, dtype, minval=-bound, maxval=bound)


def _reference(embeddings_table, length_q, length_k, max_rel):
    dist = jnp.arange(length_k)[None, :] - jnp.arange(length_q)[:, None]
    final = jnp.clip(dist, -max_rel, max_rel) + max_rel
    return embeddings_table[final]


if __name__ == "__main__":
    key = jax.random.PRNGKey(0)
    k_table, k_q, k_table2 = jax.random.split(key, 3)

    # Small config consistent with the module.
    num_units = 32
    max_relative_position = 4
    length_q = 8
    length_k = 8
    batch, heads = 2, 4

    table = _xavier_uniform(
        k_table, (2 * max_relative_position + 1, num_units))
    # q only matters for device placement in the reference implementation.
    q = jax.random.normal(k_q, (batch, heads, length_q, num_units),
                          dtype=jnp.float32)

    out = rpe_vanilla_forward(q, table, length_q, length_k,
                              max_relative_position)
    out = jax.block_until_ready(out)
    ref = _reference(table, length_q, length_k, max_relative_position)
    assert out.shape == (length_q, length_k, num_units)
    assert jnp.allclose(out, ref, atol=0.0, rtol=0.0)

    # Second check: multi-tile grid with partial edge tiles, exercising both
    # the clamped-tile fast path and the diagonal-band general path.
    P2, Lq2, Lk2, U2 = 2, 28, 36, 32
    table2 = _xavier_uniform(k_table2, (2 * P2 + 1, U2))
    out2 = rpe_vanilla_forward(q, table2, Lq2, Lk2, P2, tile_q=8, tile_k=8)
    out2 = jax.block_until_ready(out2)
    ref2 = _reference(table2, Lq2, Lk2, P2)
    assert out2.shape == (Lq2, Lk2, U2)
    assert jnp.allclose(out2, ref2, atol=0.0, rtol=0.0)

    print("KERNEL_OK")
</pallas_src>

<mosaic_0001>
module attributes {stable_mosaic.version = 11 : i64} {
  func.func @_rpe_kernel(%arg0: i32, %arg1: i32, %arg2: memref<9x256xf32, #tpu.memory_space<vmem>>, %arg3: memref<1x256xi32, #tpu.memory_space<vmem>>, %arg4: memref<8x256xf32, #tpu.memory_space<vmem>>) attributes {dimension_semantics = [#tpu.dimension_semantics<parallel>, #tpu.dimension_semantics<parallel>], iteration_bounds = array<i64: 1, 1>, scalar_prefetch = 0 : i64, scratch_operands = 0 : i64, tpu.core_type = #tpu.core_type<tc>, window_params = [{pipeline_mode = #tpu.pipeline_mode<synchronous>, transform_indices = @transform_0, window_bounds = array<i64: 9, 256>}, {pipeline_mode = #tpu.pipeline_mode<synchronous>, transform_indices = @transform_1, window_bounds = array<i64: 1, 256>}, {transform_indices = @transform_2, window_bounds = array<i64: 8, 256>}]} {
    %c8_i32 = arith.constant 8 : i32
    %0 = arith.muli %arg0, %c8_i32 : i32
    %c8_i32_0 = arith.constant 8 : i32
    %1 = arith.muli %arg1, %c8_i32_0 : i32
    %c8_i32_1 = arith.constant 8 : i32
    %2 = arith.addi %0, %c8_i32_1 : i32
    %c1_i32 = arith.constant 1 : i32
    %3 = arith.subi %2, %c1_i32 : i32
    %4 = arith.subi %1, %3 : i32
    %c8_i32_2 = arith.constant 8 : i32
    %5 = arith.addi %1, %c8_i32_2 : i32
    %c1_i32_3 = arith.constant 1 : i32
    %6 = arith.subi %5, %c1_i32_3 : i32
    %7 = arith.subi %6, %0 : i32
    %c4_i32 = arith.constant 4 : i32
    %8 = arith.cmpi sge, %4, %c4_i32 : i32
    %c-4_i32 = arith.constant -4 : i32
    %9 = arith.cmpi sle, %7, %c-4_i32 : i32
    %10 = arith.ori %8, %9 : i1
    %true = arith.constant true
    %11 = arith.xori %10, %true : i1
    %12 = arith.extui %8 : i1 to i32
    %c0_i32 = arith.constant 0 : i32
    %13 = arith.cmpi ne, %12, %c0_i32 : i32
    scf.if %13 {
      %c8 = arith.constant 8 : index
      %c0 = arith.constant 0 : index
      %20 = vector.load %arg2[%c8, %c0] : memref<9x256xf32, #tpu.memory_space<vmem>>, vector<1x256xf32>
      %21 = vector.shape_cast %20 : vector<1x256xf32> to vector<256xf32>
      %22 = vector.shape_cast %21 : vector<256xf32> to vector<1x256xf32>
      %23 = vector.broadcast %22 : vector<1x256xf32> to vector<8x256xf32>
      %c0_7 = arith.constant 0 : index
      %c0_8 = arith.constant 0 : index
      %24 = vector.load %arg4[%c0_7, %c0_8] : memref<8x256xf32, #tpu.memory_space<vmem>>, vector<8x256xf32>
      tpu.vector_store %arg4[%c0_7, %c0_8], %23 {strides = array<i32>} : memref<8x256xf32, #tpu.memory_space<vmem>>, vector<8x256xf32>,
    } else {
    }
    %true_4 = arith.constant true
    %14 = arith.xori %8, %true_4 : i1
    %15 = arith.andi %9, %14 : i1
    %16 = arith.extui %15 : i1 to i32
    %c0_i32_5 = arith.constant 0 : i32
    %17 = arith.cmpi ne, %16, %c0_i32_5 : i32
    scf.if %17 {
      %c0 = arith.constant 0 : index
      %c0_7 = arith.constant 0 : index
      %20 = vector.load %arg2[%c0, %c0_7] : memref<9x256xf32, #tpu.memory_space<vmem>>, vector<1x256xf32>
      %21 = vector.shape_cast %20 : vector<1x256xf32> to vector<256xf32>
      %22 = vector.shape_cast %21 : vector<256xf32> to vector<1x256xf32>
      %23 = vector.broadcast %22 : vector<1x256xf32> to vector<8x256xf32>
      %c0_8 = arith.constant 0 : index
      %c0_9 = arith.constant 0 : index
      %24 = vector.load %arg4[%c0_8, %c0_9] : memref<8x256xf32, #tpu.memory_space<vmem>>, vector<8x256xf32>
      tpu.vector_store %arg4[%c0_8, %c0_9], %23 {strides = array<i32>} : memref<8x256xf32, #tpu.memory_space<vmem>>, vector<8x256xf32>,
    } else {
    }
    %18 = arith.extui %11 : i1 to i32
    %c0_i32_6 = arith.constant 0 : i32
    %19 = arith.cmpi ne, %18, %c0_i32_6 : i32
    scf.if %19 {
      %20 = tpu.iota {dimensions = array<i32: 0>} : vector<8x256xi32>
      %21 = vector.broadcast %0 : i32 to vector<8x256xi32>
      %22 = arith.addi %21, %20 : vector<8x256xi32>
      %c0 = arith.constant 0 : index
      %c0_7 = arith.constant 0 : index
      %23 = vector.load %arg3[%c0, %c0_7] : memref<1x256xi32, #tpu.memory_space<vmem>>, vector<1x256xi32>
      %24 = vector.broadcast %1 : i32 to vector<1x256xi32>
      %25 = arith.addi %24, %23 : vector<1x256xi32>
      %26 = vector.broadcast %25 : vector<1x256xi32> to vector<8x256xi32>
      %27 = arith.subi %26, %22 : vector<8x256xi32>
      %c-4_i32_8 = arith.constant -4 : i32
      %c4_i32_9 = arith.constant 4 : i32
      %28 = vector.broadcast %c-4_i32_8 : i32 to vector<8x256xi32>
      %29 = arith.maxsi %28, %27 : vector<8x256xi32>
      %30 = vector.broadcast %c4_i32_9 : i32 to vector<8x256xi32>
      %31 = arith.minsi %30, %29 : vector<8x256xi32>
      %c4_i32_10 = arith.constant 4 : i32
      %32 = vector.broadcast %c4_i32_10 : i32 to vector<8x256xi32>
      %33 = arith.addi %31, %32 : vector<8x256xi32>
      %c0_11 = arith.constant 0 : index
      %c0_12 = arith.constant 0 : index
      %34 = vector.load %arg2[%c0_11, %c0_12] : memref<9x256xf32, #tpu.memory_space<vmem>>, vector<1x256xf32>
      %35 = vector.shape_cast %34 : vector<1x256xf32> to vector<256xf32>
      %36 = vector.shape_cast %35 : vector<256xf32> to vector<1x256xf32>
      %37 = vector.broadcast %36 : vector<1x256xf32> to vector<8x256xf32>
      %c1_i32_13 = arith.constant 1 : i32
      %38 = vector.broadcast %c1_i32_13 : i32 to vector<8x256xi32>
      %39 = arith.cmpi eq, %33, %38 : vector<8x256xi32>
      %c1 = arith.constant 1 : index
      %c0_14 = arith.constant 0 : index
      %40 = vector.load %arg2[%c1, %c0_14] : memref<9x256xf32, #tpu.memory_space<vmem>>, vector<1x256xf32>
      %41 = vector.shape_cast %40 : vector<1x256xf32> to vector<256xf32>
      %42 = vector.shape_cast %41 : vector<256xf32> to vector<1x256xf32>
      %43 = vector.shape_cast %42 : vector<1x256xf32> to vector<1x256xf32>
      %44 = vector.broadcast %43 : vector<1x256xf32> to vector<8x256xf32>
      %45 = arith.select %39, %44, %37 : vector<8x256xi1>, vector<8x256xf32>
      %c2_i32 = arith.constant 2 : i32
      %46 = vector.broadcast %c2_i32 : i32 to vector<8x256xi32>
      %47 = arith.cmpi eq, %33, %46 : vector<8x256xi32>
      %c2 = arith.constant 2 : index
      %c0_15 = arith.constant 0 : index
      %48 = vector.load %arg2[%c2, %c0_15] : memref<9x256xf32, #tpu.memory_space<vmem>>, vector<1x256xf32>
      %49 = vector.shape_cast %48 : vector<1x256xf32> to vector<256xf32>
      %50 = vector.shape_cast %49 : vector<256xf32> to vector<1x256xf32>
      %51 = vector.shape_cast %50 : vector<1x256xf32> to vector<1x256xf32>
      %52 = vector.broadcast %51 : vector<1x256xf32> to vector<8x256xf32>
      %53 = arith.select %47, %52, %45 : vector<8x256xi1>, vector<8x256xf32>
      %c3_i32 = arith.constant 3 : i32
      %54 = vector.broadcast %c3_i32 : i32 to vector<8x256xi32>
      %55 = arith.cmpi eq, %33, %54 : vector<8x256xi32>
      %c3 = arith.constant 3 : index
      %c0_16 = arith.constant 0 : index
      %56 = vector.load %arg2[%c3, %c0_16] : memref<9x256xf32, #tpu.memory_space<vmem>>, vector<1x256xf32>
      %57 = vector.shape_cast %56 : vector<1x256xf32> to vector<256xf32>
      %58 = vector.shape_cast %57 : vector<256xf32> to vector<1x256xf32>
      %59 = vector.shape_cast %58 : vector<1x256xf32> to vector<1x256xf32>
      %60 = vector.broadcast %59 : vector<1x256xf32> to vector<8x256xf32>
      %61 = arith.select %55, %60, %53 : vector<8x256xi1>, vector<8x256xf32>
      %c4_i32_17 = arith.constant 4 : i32
      %62 = vector.broadcast %c4_i32_17 : i32 to vector<8x256xi32>
      %63 = arith.cmpi eq, %33, %62 : vector<8x256xi32>
      %c4 = arith.constant 4 : index
      %c0_18 = arith.constant 0 : index
      %64 = vector.load %arg2[%c4, %c0_18] : memref<9x256xf32, #tpu.memory_space<vmem>>, vector<1x256xf32>
      %65 = vector.shape_cast %64 : vector<1x256xf32> to vector<256xf32>
      %66 = vector.shape_cast %65 : vector<256xf32> to vector<1x256xf32>
      %67 = vector.shape_cast %66 : vector<1x256xf32> to vector<1x256xf32>
      %68 = vector.broadcast %67 : vector<1x256xf32> to vector<8x256xf32>
      %69 = arith.select %63, %68, %61 : vector<8x256xi1>, vector<8x256xf32>
      %c5_i32 = arith.constant 5 : i32
      %70 = vector.broadcast %c5_i32 : i32 to vector<8x256xi32>
      %71 = arith.cmpi eq, %33, %70 : vector<8x256xi32>
      %c5 = arith.constant 5 : index
      %c0_19 = arith.constant 0 : index
      %72 = vector.load %arg2[%c5, %c0_19] : memref<9x256xf32, #tpu.memory_space<vmem>>, vector<1x256xf32>
      %73 = vector.shape_cast %72 : vector<1x256xf32> to vector<256xf32>
      %74 = vector.shape_cast %73 : vector<256xf32> to vector<1x256xf32>
      %75 = vector.shape_cast %74 : vector<1x256xf32> to vector<1x256xf32>
      %76 = vector.broadcast %75 : vector<1x256xf32> to vector<8x256xf32>
      %77 = arith.select %71, %76, %69 : vector<8x256xi1>, vector<8x256xf32>
      %c6_i32 = arith.constant 6 : i32
      %78 = vector.broadcast %c6_i32 : i32 to vector<8x256xi32>
      %79 = arith.cmpi eq, %33, %78 : vector<8x256xi32>
      %c6 = arith.constant 6 : index
      %c0_20 = arith.constant 0 : index
      %80 = vector.load %arg2[%c6, %c0_20] : memref<9x256xf32, #tpu.memory_space<vmem>>, vector<1x256xf32>
      %81 = vector.shape_cast %80 : vector<1x256xf32> to vector<256xf32>
      %82 = vector.shape_cast %81 : vector<256xf32> to vector<1x256xf32>
      %83 = vector.shape_cast %82 : vector<1x256xf32> to vector<1x256xf32>
      %84 = vector.broadcast %83 : vector<1x256xf32> to vector<8x256xf32>
      %85 = arith.select %79, %84, %77 : vector<8x256xi1>, vector<8x256xf32>
      %c7_i32 = arith.constant 7 : i32
      %86 = vector.broadcast %c7_i32 : i32 to vector<8x256xi32>
      %87 = arith.cmpi eq, %33, %86 : vector<8x256xi32>
      %c7 = arith.constant 7 : index
      %c0_21 = arith.constant 0 : index
      %88 = vector.load %arg2[%c7, %c0_21] : memref<9x256xf32, #tpu.memory_space<vmem>>, vector<1x256xf32>
      %89 = vector.shape_cast %88 : vector<1x256xf32> to vector<256xf32>
      %90 = vector.shape_cast %89 : vector<256xf32> to vector<1x256xf32>
      %91 = vector.shape_cast %90 : vector<1x256xf32> to vector<1x256xf32>
      %92 = vector.broadcast %91 : vector<1x256xf32> to vector<8x256xf32>
      %93 = arith.select %87, %92, %85 : vector<8x256xi1>, vector<8x256xf32>
      %c8_i32_22 = arith.constant 8 : i32
      %94 = vector.broadcast %c8_i32_22 : i32 to vector<8x256xi32>
      %95 = arith.cmpi eq, %33, %94 : vector<8x256xi32>
      %c8 = arith.constant 8 : index
      %c0_23 = arith.constant 0 : index
      %96 = vector.load %arg2[%c8, %c0_23] : memref<9x256xf32, #tpu.memory_space<vmem>>, vector<1x256xf32>
      %97 = vector.shape_cast %96 : vector<1x256xf32> to vector<256xf32>
      %98 = vector.shape_cast %97 : vector<256xf32> to vector<1x256xf32>
      %99 = vector.shape_cast %98 : vector<1x256xf32> to vector<1x256xf32>
      %100 = vector.broadcast %99 : vector<1x256xf32> to vector<8x256xf32>
      %101 = arith.select %95, %100, %93 : vector<8x256xi1>, vector<8x256xf32>
      %c0_24 = arith.constant 0 : index
      %c0_25 = arith.constant 0 : index
      %102 = vector.load %arg4[%c0_24, %c0_25] : memref<8x256xf32, #tpu.memory_space<vmem>>, vector<8x256xf32>
      tpu.vector_store %arg4[%c0_24, %c0_25], %101 {strides = array<i32>} : memref<8x256xf32, #tpu.memory_space<vmem>>, vector<8x256xf32>,
    } else {
    }
    return
  }
  func.func @transform_0(%arg0: i32, %arg1: i32) -> (i32, i32) {
    %c0_i32 = arith.constant 0 : i32
    %c0_i32_0 = arith.constant 0 : i32
    %c0_i32_1 = arith.constant 0 : i32
    return %c0_i32, %c0_i32_0 : i32, i32
  }
  func.func @transform_1(%arg0: i32, %arg1: i32) -> (i32, i32) {
    %c0_i32 = arith.constant 0 : i32
    %c0_i32_0 = arith.constant 0 : i32
    %c0_i32_1 = arith.constant 0 : i32
    return %c0_i32, %c0_i32_0 : i32, i32
  }
  func.func @transform_2(%arg0: i32, %arg1: i32) -> (i32, i32) {
    %c0_i32 = arith.constant 0 : i32
    return %arg0, %arg1 : i32, i32
  }
}

</mosaic_0001>

<llo_original>
// kernel: tpu_custom_call.1
$region0: #{tpu_custom_call.1}
  #allocation0 [shape = 'u32[]', space=smem, size = 0x4, offset = 0x4, fixed_abs, tag = 'smem constant byte address 0x4 - core index']
  #allocation1 [shape = 'u32[144,128]{1,0:T(1,128)}', space=vmem, size = 0x12000, scoped, tag = 'internal scratch']
  %s0 = inlined_call_operand.hbm [shape: f32[9,256], index: 0, kind: input, shape index: {}]
  %s1 = inlined_call_operand.hbm [shape: s32[1,256], index: 1, kind: input, shape index: {}]
  %s2 = inlined_call_operand.hbm [shape: f32[8,256], index: 2, kind: output, shape index: {}]
  %s3 = sld [smem:[#allocation0]]
  $region38: #{tpu_custom_call.1} parent=0
    _
  %s5 = ssub.s32 1, %s3
  %s6 = scalar_select 0, %s5, %s3
  $region1: #{tpu_custom_call.1} parent=0
    #allocation2 [shape = 'u8[16384]{0}', space=vmem, size = 0x4000, scoped, tag = 'input window, operand 0, single buffered']
    #allocation3 [shape = 's32[1]{0}', space=sflag, size = 0x4, scoped, tag = 'scoped memory for tpu_custom_call.1']
    #allocation4 [shape = 's32[1]{0}', space=sflag, size = 0x4, scoped, tag = 'scoped memory for tpu_custom_call.1']
    #allocation5 [shape = 'u8[1024]{0}', space=vmem, size = 0x400, scoped, tag = 'input window, operand 1, single buffered']
    #allocation6 [shape = 's32[1]{0}', space=sflag, size = 0x4, scoped, tag = 'scoped memory for tpu_custom_call.1']
    #allocation7 [shape = 'u8[8192]{0}', space=vmem, size = 0x2000, scoped, tag = 'output window, operand 0, single buffered']
    %7 = vsyncpa [#allocation3], 0
    %8 = vsyncpa [#allocation6], 0
    %9 = vsyncpa [#allocation4], 0
    // Predicated region
    $region2: #{tpu_custom_call.1} parent=1 // pred_check
      _
    $region3: #{tpu_custom_call.1} parent=1 // pred_check_branch
      %11 = sbr.rel (0) target = $region5
    $region4: #{tpu_custom_call.1} parent=1 // pred_region
      %s13 = ssub.s32 512, 512
      %14 = vsyncadd [#allocation3], %s13
      %s15 = sshll.u32 [#allocation2], 4
      %s16 = int_to_ptr.vmem [resolvable:$true] %s15
      %21 = dma.hbm_to_vmem [thread:$0]  %s0, 512, %s16, [#allocation3], 256, 256, 16
    $region5: #{tpu_custom_call.1} parent=1 // pred_fallthru
      _
    // Predicated region
    $region6: #{tpu_custom_call.1} parent=1 // pred_check
      _
    $region7: #{tpu_custom_call.1} parent=1 // pred_check_branch
      %23 = sbr.rel (0) target = $region9
    $region8: #{tpu_custom_call.1} parent=1 // pred_region
      %s25 = ssub.s32 32, 32
      %26 = vsyncadd [#allocation6], %s25
      %s28 = sshll.u32 [#allocation5], 4
      %s29 = int_to_ptr.vmem [resolvable:$true] %s28
      %31 = dma.hbm_to_vmem [thread:$0]  %s1, 32, %s29, [#allocation6]
    $region9: #{tpu_custom_call.1} parent=1 // pred_fallthru
      _
    // Predicated region
    $region10: #{tpu_custom_call.1} parent=1 // pred_check
      _
    $region11: #{tpu_custom_call.1} parent=1 // pred_check_branch
      %33 = sbr.rel (0) target = $region13
    $region12: #{tpu_custom_call.1} parent=1 // pred_region
      %34 = dma.done [#allocation3], 512
    $region13: #{tpu_custom_call.1} parent=1 // pred_fallthru
      _
    // Predicated region
    $region14: #{tpu_custom_call.1} parent=1 // pred_check
      _
    $region15: #{tpu_custom_call.1} parent=1 // pred_check_branch
      %36 = sbr.rel (0) target = $region17
    $region16: #{tpu_custom_call.1} parent=1 // pred_region
      %37 = dma.done [#allocation6], 32
    $region17: #{tpu_custom_call.1} parent=1 // pred_fallthru
      _
    %s38 = smul.u32 0, 8
    %s39 = smul.u32 0, 8
    %s40 = sadd.s32 %s38, 7
    %s41 = ssub.s32 %s39, %s40
    %s42 = sadd.s32 %s39, 7
    %s43 = ssub.s32 %s42, %s38
    %p44 = scmp.ge.s32.totalorder %s41, 4
    %p45 = scmp.le.s32.totalorder %s43, 4294967292
    %p46 = por %p44, %p45
    %p47 = pneg %p46
    // Predicated region
    $region18: #{tpu_custom_call.1} parent=1 // pred_check
      %p48 = pneg %p44
    $region19: #{tpu_custom_call.1} parent=1 // pred_check_branch
      %50 = sbr.rel (%p48) target = $region21
    $region20: #{tpu_custom_call.1} parent=1 // pred_region
      %s51 = scalar_lea.vmem [#allocation2], 16
      %v52 = vld [vmem:[%s51] ss:$8 sm:$0x3]
      %v54 = vlaneseq
      %v55 = vshrl.u32 %v54, 7
      %v56 = vsub.s32 0, %v55
      %v57 = vrot.slane %v52, %v56
      %v58 = vlaneseq
      %v59 = vshrl.u32 %v58, 7
      %v60 = vsub.s32 1, %v59
      %v61 = vrot.slane %v52, %v60
      %64 = vst [vmem:[#allocation7] sm:$0xff] %v57
      %65 = vst [vmem:[#allocation7 + $0x8] sm:$0xff] %v61
    $region21: #{tpu_custom_call.1} parent=1 // pred_fallthru
      _
    %p66 = scmp.lt.s32.totalorder %s41, 4
    %p67 = pnand %p45, %p66
    %p68 = pneg %p67
    // Predicated region
    $region22: #{tpu_custom_call.1} parent=1 // pred_check
      _
    $region23: #{tpu_custom_call.1} parent=1 // pred_check_branch
      %70 = sbr.rel (%p67) target = $region25
    $region24: #{tpu_custom_call.1} parent=1 // pred_region
      %v71 = vld [vmem:[#allocation2] ss:$8 sm:$0x3]
      %v73 = vlaneseq
      %v74 = vshrl.u32 %v73, 7
      %v75 = vsub.s32 0, %v74
      %v76 = vrot.slane %v71, %v75
      %v77 = vlaneseq
      %v78 = vshrl.u32 %v77, 7
      %v79 = vsub.s32 1, %v78
      %v80 = vrot.slane %v71, %v79
      %83 = vst [vmem:[#allocation7] sm:$0xff] %v76
      %84 = vst [vmem:[#allocation7 + $0x8] sm:$0xff] %v80
    $region25: #{tpu_custom_call.1} parent=1 // pred_fallthru
      _
    // Predicated region
    $region26: #{tpu_custom_call.1} parent=1 // pred_check
      _
    $region27: #{tpu_custom_call.1} parent=1 // pred_check_branch
      %86 = sbr.rel (%p46) target = $region29
    $region28: #{tpu_custom_call.1} parent=1 // pred_region
      %v87 = vlaneseq
      %v88 = vshrl.u32 %v87, 7
      %v89 = vstv %s38
      %v90 = vadd.s32 %v89, %v88
      %v91 = vld [vmem:[#allocation5] sm:$0x3]
      %v92 = vstv %s39
      %v93 = vadd.s32 %v92, %v91
      %v94 = vlaneseq
      %v95 = vshrl.u32 %v94, 7
      %v96 = vsub.s32 0, %v95
      %v97 = vrot.slane %v93, %v96
      %v98 = vlaneseq
      %v99 = vshrl.u32 %v98, 7
      %v100 = vsub.s32 1, %v99
      %v101 = vrot.slane %v93, %v100
      %v102 = vsub.s32 %v97, %v90
      %v103 = vsub.s32 %v101, %v90
      %vm104 = vcmp.gt.s32.totalorder %v102, 4294967292
      %v105 = vsel %vm104, %v102, 4294967292
      %vm106 = vcmp.gt.s32.totalorder %v103, 4294967292
      %v107 = vsel %vm106, %v103, 4294967292
      %vm108 = vcmp.lt.s32.totalorder %v105, 4
      %v109 = vsel %vm108, %v105, 4
      %vm110 = vcmp.lt.s32.totalorder %v107, 4
      %v111 = vsel %vm110, %v107, 4
      %v112 = vadd.s32 %v109, 4
      %v113 = vadd.s32 %v111, 4
      %v114 = vld [vmem:[#allocation2] ss:$8 sm:$0x3]
      %v116 = vlaneseq
      %v117 = vshrl.u32 %v116, 7
      %v118 = vsub.s32 0, %v117
      %v119 = vrot.slane %v114, %v118
      %v120 = vlaneseq
      %v121 = vshrl.u32 %v120, 7
      %v122 = vsub.s32 1, %v121
      %v123 = vrot.slane %v114, %v122
      %vm126 = vcmp.eq.s32.totalorder %v112, 1
      %vm127 = vcmp.eq.s32.totalorder %v113, 1
      %s128 = scalar_lea.vmem [#allocation2], 1
      %v129 = vld [vmem:[%s128] ss:$8 sm:$0x3]
      %v131 = vlaneseq
      %v132 = vshrl.u32 %v131, 7
      %v133 = vsub.s32 0, %v132
      %v134 = vrot.slane %v129, %v133
      %v135 = vlaneseq
      %v136 = vshrl.u32 %v135, 7
      %v137 = vsub.s32 1, %v136
      %v138 = vrot.slane %v129, %v137
      %v141 = vsel %vm126, %v134, %v119
      %v142 = vsel %vm127, %v138, %v123
      %vm143 = vcmp.eq.s32.totalorder %v112, 2
      %vm144 = vcmp.eq.s32.totalorder %v113, 2
      %s145 = scalar_lea.vmem [#allocation2], 2
      %v146 = vld [vmem:[%s145] ss:$8 sm:$0x3]
      %v148 = vlaneseq
      %v149 = vshrl.u32 %v148, 7
      %v150 = vsub.s32 0, %v149
      %v151 = vrot.slane %v146, %v150
      %v152 = vlaneseq
      %v153 = vshrl.u32 %v152, 7
      %v154 = vsub.s32 1, %v153
      %v155 = vrot.slane %v146, %v154
      %v158 = vsel %vm143, %v151, %v141
      %v159 = vsel %vm144, %v155, %v142
      %vm160 = vcmp.eq.s32.totalorder %v112, 3
      %vm161 = vcmp.eq.s32.totalorder %v113, 3
      %s162 = scalar_lea.vmem [#allocation2], 3
      %v163 = vld [vmem:[%s162] ss:$8 sm:$0x3]
      %v165 = vlaneseq
      %v166 = vshrl.u32 %v165, 7
      %v167 = vsub.s32 0, %v166
      %v168 = vrot.slane %v163, %v167
      %v169 = vlaneseq
      %v170 = vshrl.u32 %v169, 7
      %v171 = vsub.s32 1, %v170
      %v172 = vrot.slane %v163, %v171
      %v175 = vsel %vm160, %v168, %v158
      %v176 = vsel %vm161, %v172, %v159
      %vm177 = vcmp.eq.s32.totalorder %v112, 4
      %vm178 = vcmp.eq.s32.totalorder %v113, 4
      %s179 = scalar_lea.vmem [#allocation2], 4
      %v180 = vld [vmem:[%s179] ss:$8 sm:$0x3]
      %v182 = vlaneseq
      %v183 = vshrl.u32 %v182, 7
      %v184 = vsub.s32 0, %v183
      %v185 = vrot.slane %v180, %v184
      %v186 = vlaneseq
      %v187 = vshrl.u32 %v186, 7
      %v188 = vsub.s32 1, %v187
      %v189 = vrot.slane %v180, %v188
      %v192 = vsel %vm177, %v185, %v175
      %v193 = vsel %vm178, %v189, %v176
      %vm194 = vcmp.eq.s32.totalorder %v112, 5
      %vm195 = vcmp.eq.s32.totalorder %v113, 5
      %s196 = scalar_lea.vmem [#allocation2], 5
      %v197 = vld [vmem:[%s196] ss:$8 sm:$0x3]
      %v199 = vlaneseq
      %v200 = vshrl.u32 %v199, 7
      %v201 = vsub.s32 0, %v200
      %v202 = vrot.slane %v197, %v201
      %v203 = vlaneseq
      %v204 = vshrl.u32 %v203, 7
      %v205 = vsub.s32 1, %v204
      %v206 = vrot.slane %v197, %v205
      %v209 = vsel %vm194, %v202, %v192
      %v210 = vsel %vm195, %v206, %v193
      %vm211 = vcmp.eq.s32.totalorder %v112, 6
      %vm212 = vcmp.eq.s32.totalorder %v113, 6
      %s213 = scalar_lea.vmem [#allocation2], 6
      %v214 = vld [vmem:[%s213] ss:$8 sm:$0x3]
      %v216 = vlaneseq
      %v217 = vshrl.u32 %v216, 7
      %v218 = vsub.s32 0, %v217
      %v219 = vrot.slane %v214, %v218
      %v220 = vlaneseq
      %v221 = vshrl.u32 %v220, 7
      %v222 = vsub.s32 1, %v221
      %v223 = vrot.slane %v214, %v222
      %v226 = vsel %vm211, %v219, %v209
      %v227 = vsel %vm212, %v223, %v210
      %vm228 = vcmp.eq.s32.totalorder %v112, 7
      %vm229 = vcmp.eq.s32.totalorder %v113, 7
      %s230 = scalar_lea.vmem [#allocation2], 7
      %v231 = vld [vmem:[%s230] ss:$8 sm:$0x3]
      %v233 = vlaneseq
      %v234 = vshrl.u32 %v233, 7
      %v235 = vsub.s32 0, %v234
      %v236 = vrot.slane %v231, %v235
      %v237 = vlaneseq
      %v238 = vshrl.u32 %v237, 7
      %v239 = vsub.s32 1, %v238
      %v240 = vrot.slane %v231, %v239
      %v243 = vsel %vm228, %v236, %v226
      %v244 = vsel %vm229, %v240, %v227
      %vm245 = vcmp.eq.s32.totalorder %v112, 8
      %vm246 = vcmp.eq.s32.totalorder %v113, 8
      %s247 = scalar_lea.vmem [#allocation2], 16
      %v248 = vld [vmem:[%s247] ss:$8 sm:$0x3]
      %v250 = vlaneseq
      %v251 = vshrl.u32 %v250, 7
      %v252 = vsub.s32 0, %v251
      %v253 = vrot.slane %v248, %v252
      %v254 = vlaneseq
      %v255 = vshrl.u32 %v254, 7
      %v256 = vsub.s32 1, %v255
      %v257 = vrot.slane %v248, %v256
      %v260 = vsel %vm245, %v253, %v243
      %v261 = vsel %vm246, %v257, %v244
      %262 = vst [vmem:[#allocation7] sm:$0xff] %v260
      %263 = vst [vmem:[#allocation7 + $0x8] sm:$0xff] %v261
    $region29: #{tpu_custom_call.1} parent=1 // pred_fallthru
      _
    // Predicated region
    $region30: #{tpu_custom_call.1} parent=1 // pred_check
      _
    $region31: #{tpu_custom_call.1} parent=1 // pred_check_branch
      %265 = sbr.rel (0) target = $region33
    $region32: #{tpu_custom_call.1} parent=1 // pred_region
      %s267 = ssub.s32 256, 256
      %268 = vsyncadd [#allocation4], %s267
      %s270 = sshll.u32 [#allocation7], 4
      %s271 = int_to_ptr.vmem [resolvable:$true] %s270
      %273 = dma.vmem_to_hbm [thread:$0]  %s271, 256, %s2, [#allocation4]
    $region33: #{tpu_custom_call.1} parent=1 // pred_fallthru
      _
    // Predicated region
    $region34: #{tpu_custom_call.1} parent=1 // pred_check
      _
    $region35: #{tpu_custom_call.1} parent=1 // pred_check_branch
      %275 = sbr.rel (0) target = $region37
    $region36: #{tpu_custom_call.1} parent=1 // pred_region
      %276 = dma.done [#allocation4], 256
    $region37: #{tpu_custom_call.1} parent=1 // pred_fallthru
      _
    %277 = vsyncpa [#allocation3], 1
    %278 = vsyncpa [#allocation6], 1
    %279 = vsyncpa [#allocation4], 1

</llo_original>
